<compile_context>
chip_gen: v7x
topology: tpu7x:2x2x1
jax: 0.10.0
libtpu: 0.0.40
codegen_flags: <defaults>
</compile_context>

<pallas_src>
import functools

import jax
import jax.numpy as jnp
import numpy as np
from jax.experimental import pallas as pl
from jax.experimental.pallas import tpu as pltpu

BN_EPS = 1e-4
_LANE = 128


def _conv_stats_kernel(patch_ref, w_ref, conv_ref, sum_ref, sumsq_ref):
    """Per-image conv-as-matmul + fused BN partial statistics.

    patch_ref: (1, HW, Kp)  im2col patches (bf16 or f32)
    w_ref:     (Kp, Cp)     flattened conv weights
    conv_ref:  (1, HW, Cp)  f32 conv output (written once, no extra scratch)
    sum_ref:   (1, 1, Cp)   f32 per-image channel sum
    sumsq_ref: (1, 1, Cp)   f32 per-image channel sum of squares
    """
    acc = jnp.dot(patch_ref[0], w_ref[...],
                  preferred_element_type=jnp.float32)          # (HW, Cp) f32
    conv_ref[0] = acc
    sum_ref[0] = jnp.sum(acc, axis=0, keepdims=True)           # (1, Cp)
    sumsq_ref[0] = jnp.sum(acc * acc, axis=0, keepdims=True)   # (1, Cp)


def _bn_relu_kernel(conv_ref, sum_ref, sumsq_ref, gamma_ref, beta_ref, out_ref,
                    *, inv_count, eps):
    """Normalize (train-mode biased batch stats) + affine + ReLU per image."""
    mean = sum_ref[...] * inv_count                            # (1, Cp)
    var = sumsq_ref[...] * inv_count - mean * mean             # (1, Cp)
    scale = gamma_ref[...] * jax.lax.rsqrt(var + eps)          # (1, Cp)
    shift = beta_ref[...] - mean * scale                       # (1, Cp)
    out_ref[0] = jnp.maximum(conv_ref[0] * scale + shift, 0.0)


def _round_up(x, m):
    return ((x + m - 1) // m) * m


def conv_bn_relu2d(x_nchw, w_oihw, gamma, beta, *, eps=BN_EPS, padding=1,
                   stride=1, dilation=1, compute_dtype=jnp.bfloat16):
    """ConvBnRelu2d forward. x_nchw: (N, Cin, H, W); w_oihw: (Cout, Cin, KH, KW)."""
    N, Cin, H, W = x_nchw.shape
    Cout, Cin_w, KH, KW = w_oihw.shape
    assert Cin_w == Cin, "groups != 1 not supported"  # TODO(synk): grouped conv

    H_out = (H + 2 * padding - dilation * (KH - 1) - 1) // stride + 1
    W_out = (W + 2 * padding - dilation * (KW - 1) - 1) // stride + 1
    HW = H_out * W_out
    K = KH * KW * Cin
    Kp = _round_up(max(K, _LANE), _LANE)       # lane-dense matmul K dim
    Cp = _round_up(max(Cout, _LANE), _LANE)    # lane-dense output channels

    # --- layout plumbing in plain JAX (runs once, outside the kernels) -------
    x_nhwc = jnp.transpose(x_nchw, (0, 2, 3, 1)).astype(jnp.float32)
    x_pad = jnp.pad(x_nhwc, ((0, 0), (padding, padding), (padding, padding), (0, 0)))

    # im2col: feature index k = (kh*KW + kw)*Cin + ci  (matches weight reshape)
    slabs = []
    for kh in range(KH):
        for kw in range(KW):
            h0, w0 = kh * dilation, kw * dilation
            slabs.append(x_pad[:, h0:h0 + (H_out - 1) * stride + 1:stride,
                                  w0:w0 + (W_out - 1) * stride + 1:stride, :])
    patches = jnp.concatenate(slabs, axis=-1).reshape(N, HW, K)
    patches = jnp.pad(patches, ((0, 0), (0, 0), (0, Kp - K))).astype(compute_dtype)

    # OIHW -> (KH*KW*Cin, Cout), zero-pad to (Kp, Cp)
    w2d = jnp.transpose(w_oihw, (2, 3, 1, 0)).astype(jnp.float32).reshape(K, Cout)
    w2d = jnp.pad(w2d, ((0, Kp - K), (0, Cp - Cout))).astype(compute_dtype)

    gamma_p = jnp.pad(gamma.astype(jnp.float32).reshape(1, Cout),
                      ((0, 0), (0, Cp - Cout)))
    beta_p = jnp.pad(beta.astype(jnp.float32).reshape(1, Cout),
                     ((0, 0), (0, Cp - Cout)))

    # --- pass 1: conv matmul + per-image channel sum / sumsq -----------------
    conv_out, psum, psumsq = pl.pallas_call(
        _conv_stats_kernel,
        out_shape=(
            jax.ShapeDtypeStruct((N, HW, Cp), jnp.float32),
            jax.ShapeDtypeStruct((N, 1, Cp), jnp.float32),
            jax.ShapeDtypeStruct((N, 1, Cp), jnp.float32),
        ),
        grid=(N,),
        in_specs=[
            pl.BlockSpec((1, HW, Kp), lambda n: (n, 0, 0)),
            pl.BlockSpec((Kp, Cp), lambda n: (0, 0)),
        ],
        out_specs=(
            pl.BlockSpec((1, HW, Cp), lambda n: (n, 0, 0)),
            pl.BlockSpec((1, 1, Cp), lambda n: (n, 0, 0)),
            pl.BlockSpec((1, 1, Cp), lambda n: (n, 0, 0)),
        ),
        compiler_params=pltpu.CompilerParams(
            dimension_semantics=("parallel",)),
    )(patches, w2d)

    # tiny per-channel reduction across the batch (shape (1, Cp))
    sum_tot = jnp.sum(psum, axis=0)
    sumsq_tot = jnp.sum(psumsq, axis=0)

    # --- pass 2: BN normalize + affine + ReLU --------------------------------
    kernel2 = functools.partial(_bn_relu_kernel,
                                inv_count=1.0 / float(N * HW), eps=eps)
    out = pl.pallas_call(
        kernel2,
        out_shape=jax.ShapeDtypeStruct((N, HW, Cp), jnp.float32),
        grid=(N,),
        in_specs=[
            pl.BlockSpec((1, HW, Cp), lambda n: (n, 0, 0)),
            pl.BlockSpec((1, Cp), lambda n: (0, 0)),
            pl.BlockSpec((1, Cp), lambda n: (0, 0)),
            pl.BlockSpec((1, Cp), lambda n: (0, 0)),
            pl.BlockSpec((1, Cp), lambda n: (0, 0)),
        ],
        out_specs=pl.BlockSpec((1, HW, Cp), lambda n: (n, 0, 0)),
        compiler_params=pltpu.CompilerParams(
            dimension_semantics=("parallel",)),
    )(conv_out, sum_tot, sumsq_tot, gamma_p, beta_p)

    # slice padded channels away, back to NCHW
    out = out[:, :, :Cout].reshape(N, H_out, W_out, Cout)
    return jnp.transpose(out, (0, 3, 1, 2))


def _reference(x_nchw, w_oihw, gamma, beta, eps=BN_EPS):
    """Pure-JAX reference mirroring PyTorch ConvBnRelu2d.forward (train-mode BN)."""
    y = jax.lax.conv_general_dilated(
        x_nchw, w_oihw, window_strides=(1, 1), padding=((1, 1), (1, 1)),
        dimension_numbers=("NCHW", "OIHW", "NCHW"))
    mean = y.mean(axis=(0, 2, 3), keepdims=True)
    var = ((y - mean) ** 2).mean(axis=(0, 2, 3), keepdims=True)
    y = (y - mean) / jnp.sqrt(var + eps)
    y = y * gamma.reshape(1, -1, 1, 1) + beta.reshape(1, -1, 1, 1)
    return jnp.maximum(y, 0.0)


if __name__ == "__main__":
    key = jax.random.PRNGKey(0)
    k_x, k_w, k_g, k_b = jax.random.split(key, 4)

    N, Cin, H, W = 2, 4, 16, 16
    Cout, KH, KW = 8, 3, 3

    x = jax.random.normal(k_x, (N, Cin, H, W), dtype=jnp.float32)
    fan_in = Cin * KH * KW
    bound = 1.0 / np.sqrt(fan_in)
    w = jax.random.uniform(k_w, (Cout, Cin, KH, KW), jnp.float32, -bound, bound)
    gamma = 1.0 + 0.1 * jax.random.normal(k_g, (Cout,), dtype=jnp.float32)
    beta = 0.1 * jax.random.normal(k_b, (Cout,), dtype=jnp.float32)

    ref = jax.block_until_ready(_reference(x, w, gamma, beta))

    # Tight numerical check with f32 MXU operands.
    out_f32 = jax.block_until_ready(
        conv_bn_relu2d(x, w, gamma, beta, compute_dtype=jnp.float32))
    np.testing.assert_allclose(np.asarray(out_f32), np.asarray(ref),
                               rtol=1e-3, atol=1e-3)

    # Fast path: bf16 MXU operands, f32 accumulation / BN math.
    # Looser tolerance only accounts for bf16 rounding of the conv operands.
    out_bf16 = jax.block_until_ready(
        conv_bn_relu2d(x, w, gamma, beta, compute_dtype=jnp.bfloat16))
    np.testing.assert_allclose(np.asarray(out_bf16), np.asarray(ref),
                               rtol=2.5e-2, atol=2.5e-2)

    print("KERNEL_OK")
</pallas_src>

<mosaic_0001>
module attributes {stable_mosaic.version = 11 : i64} {
  func.func @_conv_stats_kernel(%arg0: i32, %arg1: memref<1x256x128xf32, #tpu.memory_space<vmem>>, %arg2: memref<128x128xf32, #tpu.memory_space<vmem>>, %arg3: memref<1x256x128xf32, #tpu.memory_space<vmem>>, %arg4: memref<1x1x128xf32, #tpu.memory_space<vmem>>, %arg5: memref<1x1x128xf32, #tpu.memory_space<vmem>>) attributes {dimension_semantics = [#tpu.dimension_semantics<parallel>], iteration_bounds = array<i64: 2>, scalar_prefetch = 0 : i64, scratch_operands = 0 : i64, tpu.core_type = #tpu.core_type<tc>, window_params = [{transform_indices = @transform_0, window_bounds = array<i64: 1, 256, 128>}, {pipeline_mode = #tpu.pipeline_mode<synchronous>, transform_indices = @transform_1, window_bounds = array<i64: 128, 128>}, {transform_indices = @transform_2, window_bounds = array<i64: 1, 256, 128>}, {transform_indices = @transform_3, window_bounds = array<i64: 1, 1, 128>}, {transform_indices = @transform_4, window_bounds = array<i64: 1, 1, 128>}]} {
    %c0 = arith.constant 0 : index
    %c0_0 = arith.constant 0 : index
    %c0_1 = arith.constant 0 : index
    %0 = vector.load %arg1[%c0, %c0_0, %c0_1] : memref<1x256x128xf32, #tpu.memory_space<vmem>>, vector<1x256x128xf32>
    %1 = vector.shape_cast %0 : vector<1x256x128xf32> to vector<256x128xf32>
    %c0_2 = arith.constant 0 : index
    %c0_3 = arith.constant 0 : index
    %2 = vector.load %arg2[%c0_2, %c0_3] : memref<128x128xf32, #tpu.memory_space<vmem>>, vector<128x128xf32>
    %cst = arith.constant dense<0.000000e+00> : vector<256x128xf32>
    %3 = tpu.matmul %1, %2, %cst {dimension_numbers = #tpu.dot_dimension_numbers<[1], [0], [0], [1], [0, 0, 1, 1], [], []>} : vector<256x128xf32>, vector<128x128xf32>, vector<256x128xf32> -> vector<256x128xf32>
    %c0_4 = arith.constant 0 : index
    %c0_5 = arith.constant 0 : index
    %c0_6 = arith.constant 0 : index
    %4 = vector.load %arg3[%c0_4, %c0_5, %c0_6] : memref<1x256x128xf32, #tpu.memory_space<vmem>>, vector<1x256x128xf32>
    %5 = vector.shape_cast %4 : vector<1x256x128xf32> to vector<256x128xf32>
    %6 = vector.shape_cast %3 : vector<256x128xf32> to vector<1x256x128xf32>
    tpu.vector_store %arg3[%c0_4, %c0_5, %c0_6], %6 {strides = array<i32>} : memref<1x256x128xf32, #tpu.memory_space<vmem>>, vector<1x256x128xf32>,
    %cst_7 = arith.constant dense<0.000000e+00> : vector<128xf32>
    %7 = vector.multi_reduction <add>, %3, %cst_7 [0] : vector<256x128xf32> to vector<128xf32>
    %8 = vector.shape_cast %7 : vector<128xf32> to vector<1x128xf32>
    %c0_8 = arith.constant 0 : index
    %c0_9 = arith.constant 0 : index
    %c0_10 = arith.constant 0 : index
    %9 = vector.load %arg4[%c0_8, %c0_9, %c0_10] : memref<1x1x128xf32, #tpu.memory_space<vmem>>, vector<1x1x128xf32>
    %10 = vector.shape_cast %9 : vector<1x1x128xf32> to vector<1x128xf32>
    %11 = vector.shape_cast %8 : vector<1x128xf32> to vector<1x1x128xf32>
    tpu.vector_store %arg4[%c0_8, %c0_9, %c0_10], %11 {strides = array<i32>} : memref<1x1x128xf32, #tpu.memory_space<vmem>>, vector<1x1x128xf32>,
    %12 = arith.mulf %3, %3 : vector<256x128xf32>
    %cst_11 = arith.constant dense<0.000000e+00> : vector<128xf32>
    %13 = vector.multi_reduction <add>, %12, %cst_11 [0] : vector<256x128xf32> to vector<128xf32>
    %14 = vector.shape_cast %13 : vector<128xf32> to vector<1x128xf32>
    %c0_12 = arith.constant 0 : index
    %c0_13 = arith.constant 0 : index
    %c0_14 = arith.constant 0 : index
    %15 = vector.load %arg5[%c0_12, %c0_13, %c0_14] : memref<1x1x128xf32, #tpu.memory_space<vmem>>, vector<1x1x128xf32>
    %16 = vector.shape_cast %15 : vector<1x1x128xf32> to vector<1x128xf32>
    %17 = vector.shape_cast %14 : vector<1x128xf32> to vector<1x1x128xf32>
    tpu.vector_store %arg5[%c0_12, %c0_13, %c0_14], %17 {strides = array<i32>} : memref<1x1x128xf32, #tpu.memory_space<vmem>>, vector<1x1x128xf32>,
    return
  }
  func.func @transform_0(%arg0: i32) -> (i32, i32, i32) {
    %c0_i32 = arith.constant 0 : i32
    %c0_i32_0 = arith.constant 0 : i32
    %c0_i32_1 = arith.constant 0 : i32
    return %arg0, %c0_i32, %c0_i32_0 : i32, i32, i32
  }
  func.func @transform_1(%arg0: i32) -> (i32, i32) {
    %c0_i32 = arith.constant 0 : i32
    %c0_i32_0 = arith.constant 0 : i32
    %c0_i32_1 = arith.constant 0 : i32
    return %c0_i32, %c0_i32_0 : i32, i32
  }
  func.func @transform_2(%arg0: i32) -> (i32, i32, i32) {
    %c0_i32 = arith.constant 0 : i32
    %c0_i32_0 = arith.constant 0 : i32
    %c0_i32_1 = arith.constant 0 : i32
    return %arg0, %c0_i32, %c0_i32_0 : i32, i32, i32
  }
  func.func @transform_3(%arg0: i32) -> (i32, i32, i32) {
    %c0_i32 = arith.constant 0 : i32
    %c0_i32_0 = arith.constant 0 : i32
    %c0_i32_1 = arith.constant 0 : i32
    return %arg0, %c0_i32, %c0_i32_0 : i32, i32, i32
  }
  func.func @transform_4(%arg0: i32) -> (i32, i32, i32) {
    %c0_i32 = arith.constant 0 : i32
    %c0_i32_0 = arith.constant 0 : i32
    %c0_i32_1 = arith.constant 0 : i32
    return %arg0, %c0_i32, %c0_i32_0 : i32, i32, i32
  }
}

</mosaic_0001>

<llo_original>
// kernel: tpu_custom_call.1
$region0: #{tpu_custom_call.1}
  #allocation0 [shape = 'u32[]', space=smem, size = 0x4, offset = 0x4, fixed_abs, tag = 'smem constant byte address 0x4 - core index']
  #allocation1 [shape = 'u32[144,128]{1,0:T(1,128)}', space=vmem, size = 0x12000, scoped, tag = 'internal scratch']
  %s0 = inlined_call_operand.hbm [shape: f32[2,256,128], index: 0, kind: input, shape index: {}]
  %s1 = inlined_call_operand.hbm [shape: f32[128,128], index: 1, kind: input, shape index: {}]
  %s2 = inlined_call_operand.hbm [shape: f32[2,256,128], index: 2, kind: output, shape index: {0}]
  %s3 = inlined_call_operand.hbm [shape: f32[2,1,128], index: 3, kind: output, shape index: {1}]
  %s4 = inlined_call_operand.hbm [shape: f32[2,1,128], index: 4, kind: output, shape index: {2}]
  %5 = xla_tuple %s2, %s3, %s4
  %s6 = sld [smem:[#allocation0]]
  $region65: #{tpu_custom_call.1} parent=0
    _
  %s8 = ssub.s32 1, %s6
  %s9 = scalar_select 0, %s8, %s6
  $region1: #{tpu_custom_call.1} parent=0
    #allocation2 [shape = 'u8[262144]{0}', space=vmem, size = 0x40000, scoped, tag = 'input window, operand 0']
    #allocation3 [shape = 's32[2]{0}', space=sflag, size = 0x8, scoped, tag = 'scoped memory for tpu_custom_call.1']
    #allocation4 [shape = 's32[2]{0}', space=sflag, size = 0x8, scoped, tag = 'scoped memory for tpu_custom_call.1']
    #allocation5 [shape = 'u8[65536]{0}', space=vmem, size = 0x10000, scoped, tag = 'input window, operand 1, single buffered']
    #allocation6 [shape = 's32[1]{0}', space=sflag, size = 0x4, scoped, tag = 'scoped memory for tpu_custom_call.1']
    #allocation7 [shape = 'u8[262144]{0}', space=vmem, size = 0x40000, scoped, tag = 'output window, operand 0']
    #allocation8 [shape = 'u8[1024]{0}', space=vmem, size = 0x400, scoped, tag = 'output window, operand 1']
    #allocation9 [shape = 's32[2]{0}', space=sflag, size = 0x8, scoped, tag = 'scoped memory for tpu_custom_call.1']
    #allocation10 [shape = 'u8[1024]{0}', space=vmem, size = 0x400, scoped, tag = 'output window, operand 2']
    %10 = vsyncpa [#allocation3], 0
    %s11 = scalar_lea.sflag [#allocation3], 1
    %12 = vsyncpa %s11, 0
    %13 = vsyncpa [#allocation6], 0
    %14 = vsyncpa [#allocation4], 0
    %s15 = scalar_lea.sflag [#allocation4], 1
    %16 = vsyncpa %s15, 0
    %17 = vsyncpa [#allocation9], 0
    %s18 = scalar_lea.sflag [#allocation9], 1
    %19 = vsyncpa %s18, 0
    loop: start=0, step=1, limit=4
    $region2: #{tpu_custom_call.1} parent=1 // loop_pre_header
      _
    $region3: #{tpu_custom_call.1} parent=1 // loop_header
      %s21 = sphi 0, %s25
      %p22 = scmp.ge.s32.totalorder %s21, 4
      %s31 = sphi 0, %s33
      %s34 = sphi 0, %s31
      %s35 = sphi 0, %s34
      %s51 = sphi 0, %s35
      %s55 = sphi 0, %s55
      %s57 = sphi 0, %s55
      %s58 = sphi 0, %s57
      %s72 = sphi 0, %s58
      %s78 = sphi 0, %s80
      %s81 = sphi 0, %s78
      %s82 = sphi 0, %s81
      %s98 = sphi 0, %s82
      %s104 = sphi 0, %s106
      %s107 = sphi 0, %s104
      %s108 = sphi 0, %s107
      %s124 = sphi 0, %s108
      %s130 = sphi 0, %s132
      %s133 = sphi 0, %s130
      %s134 = sphi 0, %s133
      %s150 = sphi 0, %s134
    $region4: #{tpu_custom_call.1} parent=1 // loop_header_branch
      %24 = sbr.rel (%p22) target = $region8
    $region5: #{tpu_custom_call.1} parent=1 // loop_body
      %s26 = ssub.s32 %s21, 1
      %s27 = ssub.s32 %s21, 2
      %s28 = sadd.s32 %s21, 1
      %s29 = ssub.s32 %s21, %s28
      %p30 = scmp.eq.s32.totalorder %s29, 0
      %s32 = sadd.s32 %s31, 1
      %s33 = scalar_select %p30, %s31, %s32
      %p36 = pneg %p30
      %p37 = scmp.eq.s32.totalorder %s21, 1
      %p38 = por %p36, %p37
      %p39 = scmp.ne.s32.totalorder %s31, %s34
      %p40 = scmp.eq.s32.totalorder %s21, 0
      %p41 = por %p39, %p40
      %p42 = scmp.ne.s32.totalorder %s31, %s34
      %p43 = scmp.eq.s32.totalorder %s26, 1
      %p44 = por %p42, %p43
      %p45 = scmp.ne.s32.totalorder %s34, %s35
      %p46 = scmp.eq.s32.totalorder %s26, 0
      %p47 = por %p45, %p46
      %p48 = scmp.ne.s32.totalorder %s34, %s35
      %p49 = scmp.eq.s32.totalorder %s27, 1
      %p50 = por %p48, %p49
      %p52 = scmp.ne.s32.totalorder %s35, %s51
      %p53 = scmp.eq.s32.totalorder %s27, 0
      %p54 = por %p52, %p53
      %s56 = sadd.s32 %s55, 1
      %p59 = scmp.eq.s32.totalorder %s21, 1
      %p60 = scmp.ne.s32.totalorder %s55, %s57
      %p61 = scmp.eq.s32.totalorder %s21, 0
      %p62 = por %p60, %p61
      %p63 = scmp.ne.s32.totalorder %s55, %s57
      %p64 = scmp.eq.s32.totalorder %s26, 1
      %p65 = por %p63, %p64
      %p66 = scmp.ne.s32.totalorder %s57, %s58
      %p67 = scmp.eq.s32.totalorder %s26, 0
      %p68 = por %p66, %p67
      %p69 = scmp.ne.s32.totalorder %s57, %s58
      %p70 = scmp.eq.s32.totalorder %s27, 1
      %p71 = por %p69, %p70
      %p73 = scmp.ne.s32.totalorder %s58, %s72
      %p74 = scmp.eq.s32.totalorder %s27, 0
      %p75 = por %p73, %p74
      %s76 = ssub.s32 %s21, %s28
      %p77 = scmp.eq.s32.totalorder %s76, 0
      %s79 = sadd.s32 %s78, 1
      %s80 = scalar_select %p77, %s78, %s79
      %p83 = pneg %p77
      %p84 = scmp.eq.s32.totalorder %s21, 1
      %p85 = por %p83, %p84
      %p86 = scmp.ne.s32.totalorder %s78, %s81
      %p87 = scmp.eq.s32.totalorder %s21, 0
      %p88 = por %p86, %p87
      %p89 = scmp.ne.s32.totalorder %s78, %s81
      %p90 = scmp.eq.s32.totalorder %s26, 1
      %p91 = por %p89, %p90
      %p92 = scmp.ne.s32.totalorder %s81, %s82
      %p93 = scmp.eq.s32.totalorder %s26, 0
      %p94 = por %p92, %p93
      %p95 = scmp.ne.s32.totalorder %s81, %s82
      %p96 = scmp.eq.s32.totalorder %s27, 1
      %p97 = por %p95, %p96
      %p99 = scmp.ne.s32.totalorder %s82, %s98
      %p100 = scmp.eq.s32.totalorder %s27, 0
      %p101 = por %p99, %p100
      %s102 = ssub.s32 %s21, %s28
      %p103 = scmp.eq.s32.totalorder %s102, 0
      %s105 = sadd.s32 %s104, 1
      %s106 = scalar_select %p103, %s104, %s105
      %p109 = pneg %p103
      %p110 = scmp.eq.s32.totalorder %s21, 1
      %p111 = por %p109, %p110
      %p112 = scmp.ne.s32.totalorder %s104, %s107
      %p113 = scmp.eq.s32.totalorder %s21, 0
      %p114 = por %p112, %p113
      %p115 = scmp.ne.s32.totalorder %s104, %s107
      %p116 = scmp.eq.s32.totalorder %s26, 1
      %p117 = por %p115, %p116
      %p118 = scmp.ne.s32.totalorder %s107, %s108
      %p119 = scmp.eq.s32.totalorder %s26, 0
      %p120 = por %p118, %p119
      %p121 = scmp.ne.s32.totalorder %s107, %s108
      %p122 = scmp.eq.s32.totalorder %s27, 1
      %p123 = por %p121, %p122
      %p125 = scmp.ne.s32.totalorder %s108, %s124
      %p126 = scmp.eq.s32.totalorder %s27, 0
      %p127 = por %p125, %p126
      %s128 = ssub.s32 %s21, %s28
      %p129 = scmp.eq.s32.totalorder %s128, 0
      %s131 = sadd.s32 %s130, 1
      %s132 = scalar_select %p129, %s130, %s131
      %p135 = pneg %p129
      %p136 = scmp.eq.s32.totalorder %s21, 1
      %p137 = por %p135, %p136
      %p138 = scmp.ne.s32.totalorder %s130, %s133
      %p139 = scmp.eq.s32.totalorder %s21, 0
      %p140 = por %p138, %p139
      %p141 = scmp.ne.s32.totalorder %s130, %s133
      %p142 = scmp.eq.s32.totalorder %s26, 1
      %p143 = por %p141, %p142
      %p144 = scmp.ne.s32.totalorder %s133, %s134
      %p145 = scmp.eq.s32.totalorder %s26, 0
      %p146 = por %p144, %p145
      %p147 = scmp.ne.s32.totalorder %s133, %s134
      %p148 = scmp.eq.s32.totalorder %s27, 1
      %p149 = por %p147, %p148
      %p151 = scmp.ne.s32.totalorder %s134, %s150
      %p152 = scmp.eq.s32.totalorder %s27, 0
      %p153 = por %p151, %p152
      %p154 = scmp.le.s32.totalorder 1, %s21
      %p155 = scmp.lt.s32.totalorder %s21, 3
      %p156 = pnand %p154, %p155
      %p157 = pneg %p156
      // Predicated region
      $region9: #{tpu_custom_call.1} parent=5 // pred_check
        _
      $region10: #{tpu_custom_call.1} parent=5 // pred_check_branch
        %159 = sbr.rel (%p156) target = $region12
      $region11: #{tpu_custom_call.1} parent=5 // pred_region
        %s160 = ssub.s32 %s21, 1
        // Predicated region
        $region13: #{tpu_custom_call.1} parent=11 // pred_check
          %p161 = pneg %p68
        $region14: #{tpu_custom_call.1} parent=11 // pred_check_branch
          %163 = sbr.rel (%p161) target = $region16
        $region15: #{tpu_custom_call.1} parent=11 // pred_region
          %s165 = ssub.s32 2048, 2048
          %166 = vsyncadd [#allocation6], %s165
          %s167 = sshll.u32 [#allocation5], 4
          %s168 = int_to_ptr.vmem [resolvable:$true] %s167
          %173 = dma.hbm_to_vmem [thread:$0]  %s1, 2048, %s168, [#allocation6], 128, 128, 8
        $region16: #{tpu_custom_call.1} parent=11 // pred_fallthru
          _
      $region12: #{tpu_custom_call.1} parent=5 // pred_fallthru
        _
      %p174 = scmp.lt.s32.totalorder %s21, 2
      // Predicated region
      $region17: #{tpu_custom_call.1} parent=5 // pred_check
        %p175 = pneg %p174
      $region18: #{tpu_custom_call.1} parent=5 // pred_check_branch
        %177 = sbr.rel (%p175) target = $region20
      $region19: #{tpu_custom_call.1} parent=5 // pred_region
        // Predicated region
        $region21: #{tpu_custom_call.1} parent=19 // pred_check
          %p178 = pneg %p41
        $region22: #{tpu_custom_call.1} parent=19 // pred_check_branch
          %180 = sbr.rel (%p178) target = $region24
        $region23: #{tpu_custom_call.1} parent=19 // pred_region
          %s181 = sand.u32 %s31, 1
          %s182 = scalar_lea.sflag [#allocation3], %s181
          %s183 = sand.u32 %s31, 1
          %s184 = smul.addr %s183, 256
          %s185 = scalar_lea.vmem [#allocation2], %s184
          %s187 = ssub.s32 4096, 4096
          %188 = vsyncadd %s182, %s187
          %s189 = smul.addr %s21, 32
          %s190 = smul.addr %s189, 128
          %s191 = scalar_lea.hbm %s0, %s190
          %s192 = sshll.u32 %s185, 4
          %s193 = int_to_ptr.vmem [resolvable:$true] %s192
          %198 = dma.hbm_to_vmem [thread:$0]  %s191, 4096, %s193, %s182, 128, 128, 8
        $region24: #{tpu_custom_call.1} parent=19 // pred_fallthru
          _
      $region20: #{tpu_custom_call.1} parent=5 // pred_fallthru
        _
      %p199 = scmp.le.s32.totalorder 1, %s21
      %p200 = scmp.lt.s32.totalorder %s21, 3
      %p201 = pnand %p199, %p200
      %p202 = pneg %p201
      // Predicated region
      $region25: #{tpu_custom_call.1} parent=5 // pred_check
        _
      $region26: #{tpu_custom_call.1} parent=5 // pred_check_branch
        %204 = sbr.rel (%p201) target = $region28
      $region27: #{tpu_custom_call.1} parent=5 // pred_region
        %s205 = ssub.s32 %s21, 1
        %s206 = sand.u32 %s34, 1
        %s207 = scalar_lea.sflag [#allocation3], %s206
        %s208 = sand.u32 %s34, 1
        %s209 = smul.addr %s208, 256
        %s210 = scalar_lea.vmem [#allocation2], %s209
        // Predicated region
        $region29: #{tpu_custom_call.1} parent=27 // pred_check
          %p211 = pneg %p47
        $region30: #{tpu_custom_call.1} parent=27 // pred_check_branch
          %213 = sbr.rel (%p211) target = $region32
        $region31: #{tpu_custom_call.1} parent=27 // pred_region
          %214 = dma.done %s207, 4096
        $region32: #{tpu_custom_call.1} parent=27 // pred_fallthru
          _
        // Predicated region
        $region33: #{tpu_custom_call.1} parent=27 // pred_check
          %p215 = pneg %p68
        $region34: #{tpu_custom_call.1} parent=27 // pred_check_branch
          %217 = sbr.rel (%p215) target = $region36
        $region35: #{tpu_custom_call.1} parent=27 // pred_region
          %218 = dma.done [#allocation6], 2048
        $region36: #{tpu_custom_call.1} parent=27 // pred_fallthru
          _
        %s219 = sand.u32 %s34, 1
        %s220 = scalar_lea.sflag [#allocation3], %s219
        %s221 = sand.u32 %s34, 1
        %s222 = smul.addr %s221, 256
        %s223 = scalar_lea.vmem [#allocation2], %s222
        %p224 = pneg %p47
        %p225 = pneg %p44
        %p226 = pneg %p68
        %p227 = pneg %p65
        %p228 = pneg %p94
        %p229 = pneg %p91
        %s230 = sand.u32 %s81, 1
        %s231 = scalar_lea.sflag [#allocation4], %s230
        %s232 = sand.u32 %s81, 1
        %s233 = smul.addr %s232, 256
        %s234 = scalar_lea.vmem [#allocation7], %s233
        %p235 = pneg %p120
        %p236 = pneg %p117
        %s237 = sand.u32 %s26, 1
        %s238 = scalar_lea.sflag [#allocation9], %s237
        %s239 = sand.u32 %s107, 1
        %s240 = scalar_lea.vmem [#allocation8], %s239
        %p241 = pneg %p146
        %p242 = pneg %p143
        %s243 = sand.u32 %s26, 1
        %s244 = scalar_lea.sflag [#allocation9], %s243
        %s245 = sand.u32 %s133, 1
        %s246 = scalar_lea.vmem [#allocation10], %s245
        %v247 = vld [vmem:[%s210] sm:$0xff]
        %v248 = vld [vmem:[%s210 + $0x8] sm:$0xff]
        %v249 = vld [vmem:[%s210 + $0x10] sm:$0xff]
        %v250 = vld [vmem:[%s210 + $0x18] sm:$0xff]
        %v251 = vld [vmem:[%s210 + $0x20] sm:$0xff]
        %v252 = vld [vmem:[%s210 + $0x28] sm:$0xff]
        %v253 = vld [vmem:[%s210 + $0x30] sm:$0xff]
        %v254 = vld [vmem:[%s210 + $0x38] sm:$0xff]
        %v255 = vld [vmem:[%s210 + $0x40] sm:$0xff]
        %v256 = vld [vmem:[%s210 + $0x48] sm:$0xff]
        %v257 = vld [vmem:[%s210 + $0x50] sm:$0xff]
        %v258 = vld [vmem:[%s210 + $0x58] sm:$0xff]
        %v259 = vld [vmem:[%s210 + $0x60] sm:$0xff]
        %v260 = vld [vmem:[%s210 + $0x68] sm:$0xff]
        %v261 = vld [vmem:[%s210 + $0x70] sm:$0xff]
        %v262 = vld [vmem:[%s210 + $0x78] sm:$0xff]
        %v263 = vld [vmem:[%s210 + $0x80] sm:$0xff]
        %v264 = vld [vmem:[%s210 + $0x88] sm:$0xff]
        %v265 = vld [vmem:[%s210 + $0x90] sm:$0xff]
        %v266 = vld [vmem:[%s210 + $0x98] sm:$0xff]
        %v267 = vld [vmem:[%s210 + $0xa0] sm:$0xff]
        %v268 = vld [vmem:[%s210 + $0xa8] sm:$0xff]
        %v269 = vld [vmem:[%s210 + $0xb0] sm:$0xff]
        %v270 = vld [vmem:[%s210 + $0xb8] sm:$0xff]
        %v271 = vld [vmem:[%s210 + $0xc0] sm:$0xff]
        %v272 = vld [vmem:[%s210 + $0xc8] sm:$0xff]
        %v273 = vld [vmem:[%s210 + $0xd0] sm:$0xff]
        %v274 = vld [vmem:[%s210 + $0xd8] sm:$0xff]
        %v275 = vld [vmem:[%s210 + $0xe0] sm:$0xff]
        %v276 = vld [vmem:[%s210 + $0xe8] sm:$0xff]
        %v277 = vld [vmem:[%s210 + $0xf0] sm:$0xff]
        %v278 = vld [vmem:[%s210 + $0xf8] sm:$0xff]
        %v279 = vld [vmem:[#allocation5] sm:$0xff]
        %v280 = vld [vmem:[#allocation5 + $0x8] sm:$0xff]
        %v281 = vld [vmem:[#allocation5 + $0x10] sm:$0xff]
        %v282 = vld [vmem:[#allocation5 + $0x18] sm:$0xff]
        %v283 = vld [vmem:[#allocation5 + $0x20] sm:$0xff]
        %v284 = vld [vmem:[#allocation5 + $0x28] sm:$0xff]
        %v285 = vld [vmem:[#allocation5 + $0x30] sm:$0xff]
        %v286 = vld [vmem:[#allocation5 + $0x38] sm:$0xff]
        %v287 = vld [vmem:[#allocation5 + $0x40] sm:$0xff]
        %v288 = vld [vmem:[#allocation5 + $0x48] sm:$0xff]
        %v289 = vld [vmem:[#allocation5 + $0x50] sm:$0xff]
        %v290 = vld [vmem:[#allocation5 + $0x58] sm:$0xff]
        %v291 = vld [vmem:[#allocation5 + $0x60] sm:$0xff]
        %v292 = vld [vmem:[#allocation5 + $0x68] sm:$0xff]
        %v293 = vld [vmem:[#allocation5 + $0x70] sm:$0xff]
        %v294 = vld [vmem:[#allocation5 + $0x78] sm:$0xff]
        %295 = vmatprep.subr.mxu0 0.0
        %296 = vmatpush1.msra.mxu0 %v279
        %297 = vmatprep.subr.mxu0 0.0
        %298 = vmatpush1.msra.mxu0 %v280
        %299 = vmatprep.subr.mxu0 0.0
        %300 = vmatpush1.msra.mxu0 %v281
        %301 = vmatprep.subr.mxu0 0.0
        %302 = vmatpush1.msra.mxu0 %v282
        %303 = vmatprep.subr.mxu0 0.0
        %304 = vmatpush1.msra.mxu0 %v283
        %305 = vmatprep.subr.mxu0 0.0
        %306 = vmatpush1.msra.mxu0 %v284
        %307 = vmatprep.subr.mxu0 0.0
        %308 = vmatpush1.msra.mxu0 %v285
        %309 = vmatprep.subr.mxu0 0.0
        %310 = vmatpush1.msra.mxu0 %v286
        %311 = vmatprep.subr.mxu0 0.0
        %312 = vmatpush1.msra.mxu0 %v287
        %313 = vmatprep.subr.mxu0 0.0
        %314 = vmatpush1.msra.mxu0 %v288
        %315 = vmatprep.subr.mxu0 0.0
        %316 = vmatpush1.msra.mxu0 %v289
        %317 = vmatprep.subr.mxu0 0.0
        %318 = vmatpush1.msra.mxu0 %v290
        %319 = vmatprep.subr.mxu0 0.0
        %320 = vmatpush1.msra.mxu0 %v291
        %321 = vmatprep.subr.mxu0 0.0
        %322 = vmatpush1.msra.mxu0 %v292
        %323 = vmatprep.subr.mxu0 0.0
        %324 = vmatpush1.msra.mxu0 %v293
        %325 = vmatprep.subr.mxu0 0.0
        %326 = vmatpush1.msra.mxu0 %v294
        %327 = vmatprep.subr.mxu0 0.0
        %328 = vmatpush1.msra.mxu0 0.0
        %329 = vmatprep.subr.mxu0 0.0
        %330 = vmatpush1.msra.mxu0 0.0
        %331 = vmatprep.subr.mxu0 0.0
        %332 = vmatpush1.msra.mxu0 0.0
        %333 = vmatprep.subr.mxu0 0.0
        %334 = vmatpush1.msra.mxu0 0.0
        %335 = vmatprep.subr.mxu0 0.0
        %336 = vmatpush1.msra.mxu0 0.0
        %337 = vmatprep.subr.mxu0 0.0
        %338 = vmatpush1.msra.mxu0 0.0
        %339 = vmatprep.subr.mxu0 0.0
        %340 = vmatpush1.msra.mxu0 0.0
        %341 = vmatprep.subr.mxu0 0.0
        %342 = vmatpush1.msra.mxu0 0.0
        %343 = vmatprep.subr.mxu0 0.0
        %344 = vmatpush1.msra.mxu0 0.0
        %345 = vmatprep.subr.mxu0 0.0
        %346 = vmatpush1.msra.mxu0 0.0
        %347 = vmatprep.subr.mxu0 0.0
        %348 = vmatpush1.msra.mxu0 0.0
        %349 = vmatprep.subr.mxu0 0.0
        %350 = vmatpush1.msra.mxu0 0.0
        %351 = vmatprep.subr.mxu0 0.0
        %352 = vmatpush1.msra.mxu0 0.0
        %353 = vmatprep.subr.mxu0 0.0
        %354 = vmatpush1.msra.mxu0 0.0
        %355 = vmatprep.subr.mxu0 0.0
        %356 = vmatpush1.msra.mxu0 0.0
        %357 = vmatprep.subr.mxu0 0.0
        %358 = vmatpush1.msra.mxu0 0.0
        %359 = vmatprep.mubr.f32.mxu0 0.0
        %360 = vmatmul.mubr.f32.gmra.mrb[0].mxu0 %v247
        %v361 = vpop.f32.mrb[0].mxu0
        %v362 = vadd.f32 0.0, %v361
        %v363 = vpop.f32.mrb[0].mxu0
        %364 = vmatprep.mubr.f32.mxu0 0.0
        %365 = vmatmul.mubr.f32.gmra.mrb[0].mxu0 %v248
        %v366 = vpop.f32.mrb[0].mxu0
        %v367 = vadd.f32 0.0, %v366
        %v368 = vpop.f32.mrb[0].mxu0
        %369 = vmatprep.mubr.f32.mxu0 0.0
        %370 = vmatmul.mubr.f32.gmra.mrb[0].mxu0 %v249
        %v371 = vpop.f32.mrb[0].mxu0
        %v372 = vadd.f32 0.0, %v371
        %v373 = vpop.f32.mrb[0].mxu0
        %374 = vmatprep.mubr.f32.mxu0 0.0
        %375 = vmatmul.mubr.f32.gmra.mrb[0].mxu0 %v250
        %v376 = vpop.f32.mrb[0].mxu0
        %v377 = vadd.f32 0.0, %v376
        %v378 = vpop.f32.mrb[0].mxu0
        %379 = vmatprep.mubr.f32.mxu0 0.0
        %380 = vmatmul.mubr.f32.gmra.mrb[0].mxu0 %v251
        %v381 = vpop.f32.mrb[0].mxu0
        %v382 = vadd.f32 0.0, %v381
        %v383 = vpop.f32.mrb[0].mxu0
        %384 = vmatprep.mubr.f32.mxu0 0.0
        %385 = vmatmul.mubr.f32.gmra.mrb[0].mxu0 %v252
        %v386 = vpop.f32.mrb[0].mxu0
        %v387 = vadd.f32 0.0, %v386
        %v388 = vpop.f32.mrb[0].mxu0
        %389 = vmatprep.mubr.f32.mxu0 0.0
        %390 = vmatmul.mubr.f32.gmra.mrb[0].mxu0 %v253
        %v391 = vpop.f32.mrb[0].mxu0
        %v392 = vadd.f32 0.0, %v391
        %v393 = vpop.f32.mrb[0].mxu0
        %394 = vmatprep.mubr.f32.mxu0 0.0
        %395 = vmatmul.mubr.f32.gmra.mrb[0].mxu0 %v254
        %v396 = vpop.f32.mrb[0].mxu0
        %v397 = vadd.f32 0.0, %v396
        %v398 = vpop.f32.mrb[0].mxu0
        %399 = vmatprep.mubr.f32.mxu0 0.0
        %400 = vmatmul.mubr.f32.gmra.mrb[0].mxu0 %v255
        %v401 = vpop.f32.mrb[0].mxu0
        %v402 = vadd.f32 0.0, %v401
        %v403 = vpop.f32.mrb[0].mxu0
        %404 = vmatprep.mubr.f32.mxu0 0.0
        %405 = vmatmul.mubr.f32.gmra.mrb[0].mxu0 %v256
        %v406 = vpop.f32.mrb[0].mxu0
        %v407 = vadd.f32 0.0, %v406
        %v408 = vpop.f32.mrb[0].mxu0
        %409 = vmatprep.mubr.f32.mxu0 0.0
        %410 = vmatmul.mubr.f32.gmra.mrb[0].mxu0 %v257
        %v411 = vpop.f32.mrb[0].mxu0
        %v412 = vadd.f32 0.0, %v411
        %v413 = vpop.f32.mrb[0].mxu0
        %414 = vmatprep.mubr.f32.mxu0 0.0
        %415 = vmatmul.mubr.f32.gmra.mrb[0].mxu0 %v258
        %v416 = vpop.f32.mrb[0].mxu0
        %v417 = vadd.f32 0.0, %v416
        %v418 = vpop.f32.mrb[0].mxu0
        %419 = vmatprep.mubr.f32.mxu0 0.0
        %420 = vmatmul.mubr.f32.gmra.mrb[0].mxu0 %v259
        %v421 = vpop.f32.mrb[0].mxu0
        %v422 = vadd.f32 0.0, %v421
        %v423 = vpop.f32.mrb[0].mxu0
        %424 = vmatprep.mubr.f32.mxu0 0.0
        %425 = vmatmul.mubr.f32.gmra.mrb[0].mxu0 %v260
        %v426 = vpop.f32.mrb[0].mxu0
        %v427 = vadd.f32 0.0, %v426
        %v428 = vpop.f32.mrb[0].mxu0
        %429 = vmatprep.mubr.f32.mxu0 0.0
        %430 = vmatmul.mubr.f32.gmra.mrb[0].mxu0 %v261
        %v431 = vpop.f32.mrb[0].mxu0
        %v432 = vadd.f32 0.0, %v431
        %v433 = vpop.f32.mrb[0].mxu0
        %434 = vmatprep.mubr.f32.mxu0 0.0
        %435 = vmatmul.mubr.f32.gmra.mrb[0].mxu0 %v262
        %v436 = vpop.f32.mrb[0].mxu0
        %v437 = vadd.f32 0.0, %v436
        %v438 = vpop.f32.mrb[0].mxu0
        %439 = vmatprep.mubr.f32.mxu0 0.0
        %440 = vmatmul.mubr.f32.gmra.mrb[0].mxu0 %v263
        %v441 = vpop.f32.mrb[0].mxu0
        %v442 = vadd.f32 0.0, %v441
        %v443 = vpop.f32.mrb[0].mxu0
        %444 = vmatprep.mubr.f32.mxu0 0.0
        %445 = vmatmul.mubr.f32.gmra.mrb[0].mxu0 %v264
        %v446 = vpop.f32.mrb[0].mxu0
        %v447 = vadd.f32 0.0, %v446
        %v448 = vpop.f32.mrb[0].mxu0
        %449 = vmatprep.mubr.f32.mxu0 0.0
        %450 = vmatmul.mubr.f32.gmra.mrb[0].mxu0 %v265
        %v451 = vpop.f32.mrb[0].mxu0
        %v452 = vadd.f32 0.0, %v451
        %v453 = vpop.f32.mrb[0].mxu0
        %454 = vmatprep.mubr.f32.mxu0 0.0
        %455 = vmatmul.mubr.f32.gmra.mrb[0].mxu0 %v266
        %v456 = vpop.f32.mrb[0].mxu0
        %v457 = vadd.f32 0.0, %v456
        %v458 = vpop.f32.mrb[0].mxu0
        %459 = vmatprep.mubr.f32.mxu0 0.0
        %460 = vmatmul.mubr.f32.gmra.mrb[0].mxu0 %v267
        %v461 = vpop.f32.mrb[0].mxu0
        %v462 = vadd.f32 0.0, %v461
        %v463 = vpop.f32.mrb[0].mxu0
        %464 = vmatprep.mubr.f32.mxu0 0.0
        %465 = vmatmul.mubr.f32.gmra.mrb[0].mxu0 %v268
        %v466 = vpop.f32.mrb[0].mxu0
        %v467 = vadd.f32 0.0, %v466
        %v468 = vpop.f32.mrb[0].mxu0
        %469 = vmatprep.mubr.f32.mxu0 0.0
        %470 = vmatmul.mubr.f32.gmra.mrb[0].mxu0 %v269
        %v471 = vpop.f32.mrb[0].mxu0
        %v472 = vadd.f32 0.0, %v471
        %v473 = vpop.f32.mrb[0].mxu0
        %474 = vmatprep.mubr.f32.mxu0 0.0
        %475 = vmatmul.mubr.f32.gmra.mrb[0].mxu0 %v270
        %v476 = vpop.f32.mrb[0].mxu0
        %v477 = vadd.f32 0.0, %v476
        %v478 = vpop.f32.mrb[0].mxu0
        %479 = vmatprep.mubr.f32.mxu0 0.0
        %480 = vmatmul.mubr.f32.gmra.mrb[0].mxu0 %v271
        %v481 = vpop.f32.mrb[0].mxu0
        %v482 = vadd.f32 0.0, %v481
        %v483 = vpop.f32.mrb[0].mxu0
        %484 = vmatprep.mubr.f32.mxu0 0.0
        %485 = vmatmul.mubr.f32.gmra.mrb[0].mxu0 %v272
        %v486 = vpop.f32.mrb[0].mxu0
        %v487 = vadd.f32 0.0, %v486
        %v488 = vpop.f32.mrb[0].mxu0
        %489 = vmatprep.mubr.f32.mxu0 0.0
        %490 = vmatmul.mubr.f32.gmra.mrb[0].mxu0 %v273
        %v491 = vpop.f32.mrb[0].mxu0
        %v492 = vadd.f32 0.0, %v491
        %v493 = vpop.f32.mrb[0].mxu0
        %494 = vmatprep.mubr.f32.mxu0 0.0
        %495 = vmatmul.mubr.f32.gmra.mrb[0].mxu0 %v274
        %v496 = vpop.f32.mrb[0].mxu0
        %v497 = vadd.f32 0.0, %v496
        %v498 = vpop.f32.mrb[0].mxu0
        %499 = vmatprep.mubr.f32.mxu0 0.0
        %500 = vmatmul.mubr.f32.gmra.mrb[0].mxu0 %v275
        %v501 = vpop.f32.mrb[0].mxu0
        %v502 = vadd.f32 0.0, %v501
        %v503 = vpop.f32.mrb[0].mxu0
        %504 = vmatprep.mubr.f32.mxu0 0.0
        %505 = vmatmul.mubr.f32.gmra.mrb[0].mxu0 %v276
        %v506 = vpop.f32.mrb[0].mxu0
        %v507 = vadd.f32 0.0, %v506
        %v508 = vpop.f32.mrb[0].mxu0
        %509 = vmatprep.mubr.f32.mxu0 0.0
        %510 = vmatmul.mubr.f32.gmra.mrb[0].mxu0 %v277
        %v511 = vpop.f32.mrb[0].mxu0
        %v512 = vadd.f32 0.0, %v511
        %v513 = vpop.f32.mrb[0].mxu0
        %514 = vmatprep.mubr.f32.mxu0 0.0
        %515 = vmatmul.mubr.f32.gmra.mrb[0].mxu0 %v278
        %v516 = vpop.f32.mrb[0].mxu0
        %v517 = vadd.f32 0.0, %v516
        %v518 = vpop.f32.mrb[0].mxu0
        %519 = vdwg.mxu0
        %520 = vst [vmem:[%s234] sm:$0xff] %v362
        %521 = vst [vmem:[%s234 + $0x8] sm:$0xff] %v367
        %522 = vst [vmem:[%s234 + $0x10] sm:$0xff] %v372
        %523 = vst [vmem:[%s234 + $0x18] sm:$0xff] %v377
        %524 = vst [vmem:[%s234 + $0x20] sm:$0xff] %v382
        %525 = vst [vmem:[%s234 + $0x28] sm:$0xff] %v387
        %526 = vst [vmem:[%s234 + $0x30] sm:$0xff] %v392
        %527 = vst [vmem:[%s234 + $0x38] sm:$0xff] %v397
        %528 = vst [vmem:[%s234 + $0x40] sm:$0xff] %v402
        %529 = vst [vmem:[%s234 + $0x48] sm:$0xff] %v407
        %530 = vst [vmem:[%s234 + $0x50] sm:$0xff] %v412
        %531 = vst [vmem:[%s234 + $0x58] sm:$0xff] %v417
        %532 = vst [vmem:[%s234 + $0x60] sm:$0xff] %v422
        %533 = vst [vmem:[%s234 + $0x68] sm:$0xff] %v427
        %534 = vst [vmem:[%s234 + $0x70] sm:$0xff] %v432
        %535 = vst [vmem:[%s234 + $0x78] sm:$0xff] %v437
        %536 = vst [vmem:[%s234 + $0x80] sm:$0xff] %v442
        %537 = vst [vmem:[%s234 + $0x88] sm:$0xff] %v447
        %538 = vst [vmem:[%s234 + $0x90] sm:$0xff] %v452
        %539 = vst [vmem:[%s234 + $0x98] sm:$0xff] %v457
        %540 = vst [vmem:[%s234 + $0xa0] sm:$0xff] %v462
        %541 = vst [vmem:[%s234 + $0xa8] sm:$0xff] %v467
        %542 = vst [vmem:[%s234 + $0xb0] sm:$0xff] %v472
        %543 = vst [vmem:[%s234 + $0xb8] sm:$0xff] %v477
        %544 = vst [vmem:[%s234 + $0xc0] sm:$0xff] %v482
        %545 = vst [vmem:[%s234 + $0xc8] sm:$0xff] %v487
        %546 = vst [vmem:[%s234 + $0xd0] sm:$0xff] %v492
        %547 = vst [vmem:[%s234 + $0xd8] sm:$0xff] %v497
        %548 = vst [vmem:[%s234 + $0xe0] sm:$0xff] %v502
        %549 = vst [vmem:[%s234 + $0xe8] sm:$0xff] %v507
        %550 = vst [vmem:[%s234 + $0xf0] sm:$0xff] %v512
        %551 = vst [vmem:[%s234 + $0xf8] sm:$0xff] %v517
        %v552 = vadd.f32 %v362, %v367
        %v553 = vadd.f32 %v552, %v372
        %v554 = vadd.f32 %v553, %v377
        %v555 = vadd.f32 %v554, %v382
        %v556 = vadd.f32 %v555, %v387
        %v557 = vadd.f32 %v556, %v392
        %v558 = vadd.f32 %v557, %v397
        %v559 = vadd.f32 %v558, %v402
        %v560 = vadd.f32 %v559, %v407
        %v561 = vadd.f32 %v560, %v412
        %v562 = vadd.f32 %v561, %v417
        %v563 = vadd.f32 %v562, %v422
        %v564 = vadd.f32 %v563, %v427
        %v565 = vadd.f32 %v564, %v432
        %v566 = vadd.f32 %v565, %v437
        %v567 = vadd.f32 %v566, %v442
        %v568 = vadd.f32 %v567, %v447
        %v569 = vadd.f32 %v568, %v452
        %v570 = vadd.f32 %v569, %v457
        %v571 = vadd.f32 %v570, %v462
        %v572 = vadd.f32 %v571, %v467
        %v573 = vadd.f32 %v572, %v472
        %v574 = vadd.f32 %v573, %v477
        %v575 = vadd.f32 %v574, %v482
        %v576 = vadd.f32 %v575, %v487
        %v577 = vadd.f32 %v576, %v492
        %v578 = vadd.f32 %v577, %v497
        %v579 = vadd.f32 %v578, %v502
        %v580 = vadd.f32 %v579, %v507
        %v581 = vadd.f32 %v580, %v512
        %v582 = vadd.f32 %v581, %v517
        %v583 = vrot.slane %v582, 4
        %v584 = vadd.f32 %v582, %v583
        %v585 = vrot.slane %v584, 2
        %v586 = vadd.f32 %v584, %v585
        %v587 = vrot.slane %v586, 1
        %v588 = vadd.f32 %v586, %v587
        %589 = vst [vmem:[%s240] sm:$0x1] %v588
        %v590 = vmul.f32 %v362, %v362
        %v591 = vmul.f32 %v367, %v367
        %v592 = vmul.f32 %v372, %v372
        %v593 = vmul.f32 %v377, %v377
        %v594 = vmul.f32 %v382, %v382
        %v595 = vmul.f32 %v387, %v387
        %v596 = vmul.f32 %v392, %v392
        %v597 = vmul.f32 %v397, %v397
        %v598 = vmul.f32 %v402, %v402
        %v599 = vmul.f32 %v407, %v407
        %v600 = vmul.f32 %v412, %v412
        %v601 = vmul.f32 %v417, %v417
        %v602 = vmul.f32 %v422, %v422
        %v603 = vmul.f32 %v427, %v427
        %v604 = vmul.f32 %v432, %v432
        %v605 = vmul.f32 %v437, %v437
        %v606 = vmul.f32 %v442, %v442
        %v607 = vmul.f32 %v447, %v447
        %v608 = vmul.f32 %v452, %v452
        %v609 = vmul.f32 %v457, %v457
        %v610 = vmul.f32 %v462, %v462
        %v611 = vmul.f32 %v467, %v467
        %v612 = vmul.f32 %v472, %v472
        %v613 = vmul.f32 %v477, %v477
        %v614 = vmul.f32 %v482, %v482
        %v615 = vmul.f32 %v487, %v487
        %v616 = vmul.f32 %v492, %v492
        %v617 = vmul.f32 %v497, %v497
        %v618 = vmul.f32 %v502, %v502
        %v619 = vmul.f32 %v507, %v507
        %v620 = vmul.f32 %v512, %v512
        %v621 = vmul.f32 %v517, %v517
        %v622 = vadd.f32 %v590, %v591
        %v623 = vadd.f32 %v622, %v592
        %v624 = vadd.f32 %v623, %v593
        %v625 = vadd.f32 %v624, %v594
        %v626 = vadd.f32 %v625, %v595
        %v627 = vadd.f32 %v626, %v596
        %v628 = vadd.f32 %v627, %v597
        %v629 = vadd.f32 %v628, %v598
        %v630 = vadd.f32 %v629, %v599
        %v631 = vadd.f32 %v630, %v600
        %v632 = vadd.f32 %v631, %v601
        %v633 = vadd.f32 %v632, %v602
        %v634 = vadd.f32 %v633, %v603
        %v635 = vadd.f32 %v634, %v604
        %v636 = vadd.f32 %v635, %v605
        %v637 = vadd.f32 %v636, %v606
        %v638 = vadd.f32 %v637, %v607
        %v639 = vadd.f32 %v638, %v608
        %v640 = vadd.f32 %v639, %v609
        %v641 = vadd.f32 %v640, %v610
        %v642 = vadd.f32 %v641, %v611
        %v643 = vadd.f32 %v642, %v612
        %v644 = vadd.f32 %v643, %v613
        %v645 = vadd.f32 %v644, %v614
        %v646 = vadd.f32 %v645, %v615
        %v647 = vadd.f32 %v646, %v616
        %v648 = vadd.f32 %v647, %v617
        %v649 = vadd.f32 %v648, %v618
        %v650 = vadd.f32 %v649, %v619
        %v651 = vadd.f32 %v650, %v620
        %v652 = vadd.f32 %v651, %v621
        %v653 = vrot.slane %v652, 4
        %v654 = vadd.f32 %v652, %v653
        %v655 = vrot.slane %v654, 2
        %v656 = vadd.f32 %v654, %v655
        %v657 = vrot.slane %v656, 1
        %v658 = vadd.f32 %v656, %v657
        %659 = vst [vmem:[%s246] sm:$0x1] %v658
        %s660 = sand.u32 %s81, 1
        %s661 = scalar_lea.sflag [#allocation4], %s660
        %s662 = sand.u32 %s81, 1
        %s663 = smul.addr %s662, 256
        %s664 = scalar_lea.vmem [#allocation7], %s663
        %s665 = sand.u32 %s26, 1
        %s666 = scalar_lea.sflag [#allocation9], %s665
        %s667 = sand.u32 %s107, 1
        %s668 = scalar_lea.vmem [#allocation8], %s667
        %s669 = sand.u32 %s26, 1
        %s670 = scalar_lea.sflag [#allocation9], %s669
        %s671 = sand.u32 %s133, 1
        %s672 = scalar_lea.vmem [#allocation10], %s671
        // Predicated region
        $region37: #{tpu_custom_call.1} parent=27 // pred_check
          %p673 = pneg %p91
        $region38: #{tpu_custom_call.1} parent=27 // pred_check_branch
          %675 = sbr.rel (%p673) target = $region40
        $region39: #{tpu_custom_call.1} parent=27 // pred_region
          %s677 = ssub.s32 4096, 4096
          %678 = vsyncadd %s661, %s677
          %s679 = smul.addr %s26, 32
          %s680 = smul.addr %s679, 128
          %s681 = scalar_lea.hbm %s2, %s680
          %s682 = sshll.u32 %s664, 4
          %s683 = int_to_ptr.vmem [resolvable:$true] %s682
          %688 = dma.vmem_to_hbm [thread:$0]  %s683, 4096, %s681, %s661, 128, 128, 8
        $region40: #{tpu_custom_call.1} parent=27 // pred_fallthru
          _
        // Predicated region
        $region41: #{tpu_custom_call.1} parent=27 // pred_check
          %p689 = pneg %p117
        $region42: #{tpu_custom_call.1} parent=27 // pred_check_branch
          %691 = sbr.rel (%p689) target = $region44
        $region43: #{tpu_custom_call.1} parent=27 // pred_region
          %s693 = ssub.s32 16, 16
          %694 = vsyncadd %s666, %s693
          %s695 = smul.addr %s26, 16
          %s696 = scalar_lea.hbm %s3, %s695
          %s698 = sshll.u32 %s668, 4
          %s699 = int_to_ptr.vmem [resolvable:$true] %s698
          %701 = dma.vmem_to_hbm [thread:$0]  %s699, 16, %s696, %s666
        $region44: #{tpu_custom_call.1} parent=27 // pred_fallthru
          _
        // Predicated region
        $region45: #{tpu_custom_call.1} parent=27 // pred_check
          %p702 = pneg %p143
        $region46: #{tpu_custom_call.1} parent=27 // pred_check_branch
          %704 = sbr.rel (%p702) target = $region48
        $region47: #{tpu_custom_call.1} parent=27 // pred_region
          %s706 = ssub.s32 16, 16
          %707 = vsyncadd %s670, %s706
          %s708 = smul.addr %s26, 16
          %s709 = scalar_lea.hbm %s4, %s708
          %s711 = sshll.u32 %s672, 4
          %s712 = int_to_ptr.vmem [resolvable:$true] %s711
          %714 = dma.vmem_to_hbm [thread:$0]  %s712, 16, %s709, %s670
        $region48: #{tpu_custom_call.1} parent=27 // pred_fallthru
          _
      $region28: #{tpu_custom_call.1} parent=5 // pred_fallthru
        _
      %p715 = scmp.le.s32.totalorder 2, %s21
      // Predicated region
      $region49: #{tpu_custom_call.1} parent=5 // pred_check
        %p716 = pneg %p715
      $region50: #{tpu_custom_call.1} parent=5 // pred_check_branch
        %718 = sbr.rel (%p716) target = $region52
      $region51: #{tpu_custom_call.1} parent=5 // pred_region
        %s719 = ssub.s32 %s21, 2
        // Predicated region
        $region53: #{tpu_custom_call.1} parent=51 // pred_check
          %p720 = pneg %p97
        $region54: #{tpu_custom_call.1} parent=51 // pred_check_branch
          %722 = sbr.rel (%p720) target = $region56
        $region55: #{tpu_custom_call.1} parent=51 // pred_region
          %s723 = sand.u32 %s82, 1
          %s724 = scalar_lea.sflag [#allocation4], %s723
          %s725 = sand.u32 %s82, 1
          %s726 = smul.addr %s725, 256
          %s727 = scalar_lea.vmem [#allocation7], %s726
          %728 = dma.done %s724, 4096
        $region56: #{tpu_custom_call.1} parent=51 // pred_fallthru
          _
        // Predicated region
        $region57: #{tpu_custom_call.1} parent=51 // pred_check
          %p729 = pneg %p123
        $region58: #{tpu_custom_call.1} parent=51 // pred_check_branch
          %731 = sbr.rel (%p729) target = $region60
        $region59: #{tpu_custom_call.1} parent=51 // pred_region
          %s732 = sand.u32 %s27, 1
          %s733 = scalar_lea.sflag [#allocation9], %s732
          %s734 = sand.u32 %s108, 1
          %s735 = scalar_lea.vmem [#allocation8], %s734
          %736 = dma.done %s733, 16
        $region60: #{tpu_custom_call.1} parent=51 // pred_fallthru
          _
        // Predicated region
        $region61: #{tpu_custom_call.1} parent=51 // pred_check
          %p737 = pneg %p149
        $region62: #{tpu_custom_call.1} parent=51 // pred_check_branch
          %739 = sbr.rel (%p737) target = $region64
        $region63: #{tpu_custom_call.1} parent=51 // pred_region
          %s740 = sand.u32 %s27, 1
          %s741 = scalar_lea.sflag [#allocation9], %s740
          %s742 = sand.u32 %s134, 1
          %s743 = scalar_lea.vmem [#allocation10], %s742
          %744 = dma.done %s741, 16
        $region64: #{tpu_custom_call.1} parent=51 // pred_fallthru
          _
      $region52: #{tpu_custom_call.1} parent=5 // pred_fallthru
        _
    $region6: #{tpu_custom_call.1} parent=1 // loop_footer
      %s25 = sadd.s32 1, %s21
    $region7: #{tpu_custom_call.1} parent=1 // loop_footer_branch
      %20 = sbr.rel target = $region3
    $region8: #{tpu_custom_call.1} parent=1 // loop_exit
      _
    %745 = vsyncpa [#allocation3], 1
    %s746 = scalar_lea.sflag [#allocation3], 1
    %747 = vsyncpa %s746, 1
    %748 = vsyncpa [#allocation6], 1
    %749 = vsyncpa [#allocation4], 1
    %s750 = scalar_lea.sflag [#allocation4], 1
    %751 = vsyncpa %s750, 1
    %752 = vsyncpa [#allocation9], 1
    %s753 = scalar_lea.sflag [#allocation9], 1
    %754 = vsyncpa %s753, 1

</llo_original>
